<compile_context>
chip_gen: v5e
topology: v5e:2x2
jax: 0.10.0
libtpu: 0.0.40
codegen_flags: <defaults>
</compile_context>

<pallas_src>
import jax
import jax.numpy as jnp
from jax.experimental import pallas as pl
from jax.experimental.pallas import tpu as pltpu


def _round_up(x, m):
    return ((x + m - 1) // m) * m


def make_textcnn_kernel(filter_sizes, seq_len, num_filters, batch_tile, ncols_pad):
    S = seq_len
    F = num_filters
    tb = batch_tile

    def kernel(emb_ref, wcat_ref, cb_ref, wout_ref, bias_ref, out_ref):
        # emb_ref : (tb*S, E) bf16   -- batch and time collapsed into M
        # wcat_ref: (E, ncols_pad) bf16  -- all (branch, k) conv slices, zero-padded
        # cb_ref  : (1, NFT) f32     -- concatenated conv biases
        # wout_ref: (NFT, C_pad) bf16
        # bias_ref: (1, C_pad) f32
        # out_ref : (tb, C_pad) f32

        # One lane-dense MXU push per tile, f32 accumulation.
        scores = jnp.dot(emb_ref[...], wcat_ref[...],
                         preferred_element_type=jnp.float32)   # (tb*S, ncols_pad)
        # Leading-dim split only (S == 8 keeps this tile-aligned / layout-free).
        scores = scores.reshape(tb, S, ncols_pad)

        # Per-branch time shift-add + max-pool over time (f32, VPU/XLU).
        col = 0
        pooled_parts = []
        for fs in filter_sizes:
            num_pos = S - fs + 1
            acc = scores[:, 0:num_pos, col:col + F]
            col += F
            for k in range(1, fs):
                acc = acc + scores[:, k:k + num_pos, col:col + F]
                col += F
            pooled_parts.append(jnp.max(acc, axis=1))           # (tb, F)

        feat = jnp.concatenate(pooled_parts, axis=-1)            # (tb, NFT)
        # bias + ReLU hoisted past the max (monotone, position-independent bias).
        feat = jnp.maximum(feat + cb_ref[...], 0.0)

        # Single final matmul into lane-dense (128-padded) logits.
        logits = jnp.dot(feat.astype(jnp.bfloat16), wout_ref[...],
                         preferred_element_type=jnp.float32)     # (tb, C_pad)
        out_ref[...] = logits + bias_ref[...]

    return kernel


def textcnn_forward(emb, conv_ws, conv_bs, w_out, bias, *, filter_sizes,
                    seq_len, num_filters, num_classes, batch_tile=128):
    """emb: (B, S, E) f32, conv_ws[i]: (fs_i, E, F), conv_bs[i]: (1, F),
    w_out: (F*len(fs), C), bias: (C,).

    batch_tile: rows of the batch processed per grid step. Default 128; sweep
    128-512 for large B. On v7x (64 MiB VMEM, 2 TCs) prefer tiles that keep
    grid >= 2 steps so both TensorCores are used; VMEM use here is tiny
    (~tb*S*max(E,128)*2B double-buffered + tb*128*4B out), so the default
    scoped limit is never a concern at these sizes.
    """
    B, S, E = emb.shape
    assert S == seq_len
    assert seq_len >= max(filter_sizes), "sequence_length must be >= max filter size"
    n = len(filter_sizes)
    F = num_filters
    nft = F * n
    c_pad = _round_up(max(num_classes, 128), 128)          # lane-dense output
    ncols = sum(filter_sizes) * F                           # all (branch,k) slices
    ncols_pad = _round_up(max(ncols, 128), 128)             # lane-dense scores

    tb = max(8, min(batch_tile, _round_up(B, 8)))
    b_pad = _round_up(B, tb)

    # --- wrapper-side packing / casts (halves HBM traffic for the big operand) ---
    emb_p = jnp.pad(emb, ((0, b_pad - B), (0, 0), (0, 0)))
    emb2d = emb_p.reshape(b_pad * S, E).astype(jnp.bfloat16)        # (B_pad*S, E)

    # W_cat columns: [branch0 k=0 | branch0 k=1 | ... | branch_{n-1} k=fs-1], zero-padded.
    w_cat = jnp.zeros((E, ncols_pad), jnp.float32)
    col = 0
    for i, fs in enumerate(filter_sizes):
        for k in range(fs):
            w_cat = w_cat.at[:, col:col + F].set(conv_ws[i][k])
            col += F
    w_cat = w_cat.astype(jnp.bfloat16)

    cb_cat = jnp.concatenate(
        [b.reshape(1, F).astype(jnp.float32) for b in conv_bs], axis=-1)  # (1, NFT)

    w_out_pad = jnp.zeros((nft, c_pad), jnp.bfloat16)
    w_out_pad = w_out_pad.at[:, :num_classes].set(w_out.astype(jnp.bfloat16))
    bias_pad = jnp.zeros((1, c_pad), jnp.float32)
    bias_pad = bias_pad.at[:, :num_classes].set(bias.reshape(1, -1).astype(jnp.float32))

    kernel = make_textcnn_kernel(filter_sizes, seq_len, num_filters, tb, ncols_pad)

    out = pl.pallas_call(
        kernel,
        out_shape=jax.ShapeDtypeStruct((b_pad, c_pad), jnp.float32),
        grid=(b_pad // tb,),
        in_specs=[
            pl.BlockSpec((tb * S, E), lambda b: (b, 0)),     # embeddings (tiled on batch)
            pl.BlockSpec((E, ncols_pad), lambda b: (0, 0)),  # fused conv weights
            pl.BlockSpec((1, nft), lambda b: (0, 0)),        # fused conv biases
            pl.BlockSpec((nft, c_pad), lambda b: (0, 0)),    # final linear weight
            pl.BlockSpec((1, c_pad), lambda b: (0, 0)),      # final bias
        ],
        out_specs=pl.BlockSpec((tb, c_pad), lambda b: (b, 0)),
        compiler_params=pltpu.CompilerParams(
            dimension_semantics=("parallel",)),
    )(emb2d, w_cat, cb_cat, w_out_pad, bias_pad)

    return out[:B, :num_classes]


def textcnn_reference(emb, conv_ws, conv_bs, w_out, bias, *, filter_sizes,
                      seq_len, num_filters):
    """Pure-JAX f32 reference mirroring the PyTorch forward (relu before max)."""
    pooled = []
    for i, fs in enumerate(filter_sizes):
        num_pos = seq_len - fs + 1
        scores = 0.0
        for k in range(fs):
            scores = scores + jnp.einsum("bte,ef->btf",
                                         emb[:, k:k + num_pos, :], conv_ws[i][k])
        h = jax.nn.relu(scores + conv_bs[i][None, :, :])      # (B, num_pos, F)
        pooled.append(jnp.max(h, axis=1))                     # (B, F)
    feat = jnp.concatenate(pooled, axis=-1)
    return feat @ w_out + bias[None, :]


if __name__ == "__main__":
    # small config consistent with the module's forward
    batch = 2
    seq_len = 8            # args.sequence_length
    emb_size = 16          # args.embedding_size
    num_filters = 8        # args.num_filters
    filter_sizes = (2, 3, 4)   # args.filter_sizes
    num_classes = 4
    vocab_size = 32
    num_filters_total = num_filters * len(filter_sizes)

    key = jax.random.PRNGKey(0)
    keys = jax.random.split(key, 3 + 2 * len(filter_sizes))

    # token indices (B, S)
    X = jax.random.randint(keys[0], (batch, seq_len), 0, vocab_size)

    # nn.Embedding(vocab_size, embedding_size)
    W_emb = 0.1 * jax.random.normal(keys[1], (vocab_size, emb_size), jnp.float32)

    # nn.Conv2d(1, num_filters, (fs, emb)) -> kernel layout (fs, E, F)
    conv_ws, conv_bs = [], []
    for i, fs in enumerate(filter_sizes):
        conv_ws.append(0.1 * jax.random.normal(
            keys[2 + 2 * i], (fs, emb_size, num_filters), jnp.float32))
        conv_bs.append(0.1 * jax.random.normal(
            keys[3 + 2 * i], (1, num_filters), jnp.float32))

    # nn.Linear(num_filters_total, num_classes, bias=False) -> pass W.T
    w_out = 0.1 * jax.random.normal(
        keys[2 + 2 * len(filter_sizes)], (num_filters_total, num_classes),
        jnp.float32)
    # self.Bias = nn.Parameter(torch.ones([num_classes]))
    bias = jnp.ones((num_classes,), jnp.float32)

    # embedding lookup (glue, outside the kernel)
    emb = W_emb[X]                         # (B, S, E)

    out = textcnn_forward(
        emb, conv_ws, conv_bs, w_out, bias,
        filter_sizes=filter_sizes, seq_len=seq_len,
        num_filters=num_filters, num_classes=num_classes)
    jax.block_until_ready(out)
    assert out.shape == (batch, num_classes)

    ref = textcnn_reference(
        emb, conv_ws, conv_bs, w_out, bias,
        filter_sizes=filter_sizes, seq_len=seq_len, num_filters=num_filters)
    assert jnp.allclose(out, ref, atol=5e-2, rtol=5e-2), "mismatch vs f32 reference"

    print("KERNEL_OK")
</pallas_src>

<mosaic_0001>
module attributes {stable_mosaic.version = 11 : i64} {
  func.func @kernel(%arg0: i32, %arg1: memref<64x16xbf16, #tpu.memory_space<vmem>>, %arg2: memref<16x128xbf16, #tpu.memory_space<vmem>>, %arg3: memref<1x24xf32, #tpu.memory_space<vmem>>, %arg4: memref<24x128xbf16, #tpu.memory_space<vmem>>, %arg5: memref<1x128xf32, #tpu.memory_space<vmem>>, %arg6: memref<8x128xf32, #tpu.memory_space<vmem>>) attributes {dimension_semantics = [#tpu.dimension_semantics<parallel>], iteration_bounds = array<i64: 1>, scalar_prefetch = 0 : i64, scratch_operands = 0 : i64, tpu.core_type = #tpu.core_type<tc>, window_params = [{transform_indices = @transform_0, window_bounds = array<i64: 64, 16>}, {pipeline_mode = #tpu.pipeline_mode<synchronous>, transform_indices = @transform_1, window_bounds = array<i64: 16, 128>}, {pipeline_mode = #tpu.pipeline_mode<synchronous>, transform_indices = @transform_2, window_bounds = array<i64: 1, 24>}, {pipeline_mode = #tpu.pipeline_mode<synchronous>, transform_indices = @transform_3, window_bounds = array<i64: 24, 128>}, {pipeline_mode = #tpu.pipeline_mode<synchronous>, transform_indices = @transform_4, window_bounds = array<i64: 1, 128>}, {transform_indices = @transform_5, window_bounds = array<i64: 8, 128>}]} {
    %c0 = arith.constant 0 : index
    %c0_0 = arith.constant 0 : index
    %0 = vector.load %arg1[%c0, %c0_0] : memref<64x16xbf16, #tpu.memory_space<vmem>>, vector<64x16xbf16>
    %c0_1 = arith.constant 0 : index
    %c0_2 = arith.constant 0 : index
    %1 = vector.load %arg2[%c0_1, %c0_2] : memref<16x128xbf16, #tpu.memory_space<vmem>>, vector<16x128xbf16>
    %cst = arith.constant dense<0.000000e+00> : vector<64x128xf32>
    %2 = tpu.matmul %0, %1, %cst {dimension_numbers = #tpu.dot_dimension_numbers<[1], [0], [0], [1], [0, 0, 1, 1], [], []>} : vector<64x16xbf16>, vector<16x128xbf16>, vector<64x128xf32> -> vector<64x128xf32>
    %3 = vector.shape_cast %2 : vector<64x128xf32> to vector<8x8x128xf32>
    %4 = vector.extract_strided_slice %3 {offsets = [0, 0, 0], sizes = [8, 7, 8], strides = [1, 1, 1]} : vector<8x8x128xf32> to vector<8x7x8xf32>
    %5 = vector.extract_strided_slice %3 {offsets = [0, 1, 8], sizes = [8, 7, 8], strides = [1, 1, 1]} : vector<8x8x128xf32> to vector<8x7x8xf32>
    %6 = arith.addf %4, %5 : vector<8x7x8xf32>
    %cst_3 = arith.constant dense<0xFF800000> : vector<8x8xf32>
    %7 = vector.multi_reduction <maximumf>, %6, %cst_3 [1] : vector<8x7x8xf32> to vector<8x8xf32>
    %8 = vector.extract_strided_slice %3 {offsets = [0, 0, 16], sizes = [8, 6, 8], strides = [1, 1, 1]} : vector<8x8x128xf32> to vector<8x6x8xf32>
    %9 = vector.extract_strided_slice %3 {offsets = [0, 1, 24], sizes = [8, 6, 8], strides = [1, 1, 1]} : vector<8x8x128xf32> to vector<8x6x8xf32>
    %10 = arith.addf %8, %9 : vector<8x6x8xf32>
    %11 = vector.extract_strided_slice %3 {offsets = [0, 2, 32], sizes = [8, 6, 8], strides = [1, 1, 1]} : vector<8x8x128xf32> to vector<8x6x8xf32>
    %12 = arith.addf %10, %11 : vector<8x6x8xf32>
    %cst_4 = arith.constant dense<0xFF800000> : vector<8x8xf32>
    %13 = vector.multi_reduction <maximumf>, %12, %cst_4 [1] : vector<8x6x8xf32> to vector<8x8xf32>
    %14 = vector.extract_strided_slice %3 {offsets = [0, 0, 40], sizes = [8, 5, 8], strides = [1, 1, 1]} : vector<8x8x128xf32> to vector<8x5x8xf32>
    %15 = vector.extract_strided_slice %3 {offsets = [0, 1, 48], sizes = [8, 5, 8], strides = [1, 1, 1]} : vector<8x8x128xf32> to vector<8x5x8xf32>
    %16 = arith.addf %14, %15 : vector<8x5x8xf32>
    %17 = vector.extract_strided_slice %3 {offsets = [0, 2, 56], sizes = [8, 5, 8], strides = [1, 1, 1]} : vector<8x8x128xf32> to vector<8x5x8xf32>
    %18 = arith.addf %16, %17 : vector<8x5x8xf32>
    %19 = vector.extract_strided_slice %3 {offsets = [0, 3, 64], sizes = [8, 5, 8], strides = [1, 1, 1]} : vector<8x8x128xf32> to vector<8x5x8xf32>
    %20 = arith.addf %18, %19 : vector<8x5x8xf32>
    %cst_5 = arith.constant dense<0xFF800000> : vector<8x8xf32>
    %21 = vector.multi_reduction <maximumf>, %20, %cst_5 [1] : vector<8x5x8xf32> to vector<8x8xf32>
    %22 = tpu.concatenate %7, %13, %21 in 1 : vector<8x8xf32>, vector<8x8xf32>, vector<8x8xf32> -> vector<8x24xf32>
    %c0_6 = arith.constant 0 : index
    %c0_7 = arith.constant 0 : index
    %23 = vector.load %arg3[%c0_6, %c0_7] : memref<1x24xf32, #tpu.memory_space<vmem>>, vector<1x24xf32>
    %24 = vector.broadcast %23 : vector<1x24xf32> to vector<8x24xf32>
    %25 = arith.addf %22, %24 : vector<8x24xf32>
    %cst_8 = arith.constant 0.000000e+00 : f32
    %26 = vector.broadcast %cst_8 : f32 to vector<8x24xf32>
    %27 = arith.maximumf %25, %26 : vector<8x24xf32>
    %28 = arith.truncf %27 : vector<8x24xf32> to vector<8x24xbf16>
    %c0_9 = arith.constant 0 : index
    %c0_10 = arith.constant 0 : index
    %29 = vector.load %arg4[%c0_9, %c0_10] : memref<24x128xbf16, #tpu.memory_space<vmem>>, vector<24x128xbf16>
    %cst_11 = arith.constant dense<0.000000e+00> : vector<8x128xf32>
    %30 = tpu.matmul %28, %29, %cst_11 {dimension_numbers = #tpu.dot_dimension_numbers<[1], [0], [0], [1], [0, 0, 1, 1], [], []>} : vector<8x24xbf16>, vector<24x128xbf16>, vector<8x128xf32> -> vector<8x128xf32>
    %c0_12 = arith.constant 0 : index
    %c0_13 = arith.constant 0 : index
    %31 = vector.load %arg5[%c0_12, %c0_13] : memref<1x128xf32, #tpu.memory_space<vmem>>, vector<1x128xf32>
    %32 = vector.broadcast %31 : vector<1x128xf32> to vector<8x128xf32>
    %33 = arith.addf %30, %32 : vector<8x128xf32>
    %c0_14 = arith.constant 0 : index
    %c0_15 = arith.constant 0 : index
    %34 = vector.load %arg6[%c0_14, %c0_15] : memref<8x128xf32, #tpu.memory_space<vmem>>, vector<8x128xf32>
    tpu.vector_store %arg6[%c0_14, %c0_15], %33 {strides = array<i32>} : memref<8x128xf32, #tpu.memory_space<vmem>>, vector<8x128xf32>,
    return
  }
  func.func @transform_0(%arg0: i32) -> (i32, i32) {
    %c0_i32 = arith.constant 0 : i32
    %c0_i32_0 = arith.constant 0 : i32
    return %arg0, %c0_i32 : i32, i32
  }
  func.func @transform_1(%arg0: i32) -> (i32, i32) {
    %c0_i32 = arith.constant 0 : i32
    %c0_i32_0 = arith.constant 0 : i32
    %c0_i32_1 = arith.constant 0 : i32
    return %c0_i32, %c0_i32_0 : i32, i32
  }
  func.func @transform_2(%arg0: i32) -> (i32, i32) {
    %c0_i32 = arith.constant 0 : i32
    %c0_i32_0 = arith.constant 0 : i32
    %c0_i32_1 = arith.constant 0 : i32
    return %c0_i32, %c0_i32_0 : i32, i32
  }
  func.func @transform_3(%arg0: i32) -> (i32, i32) {
    %c0_i32 = arith.constant 0 : i32
    %c0_i32_0 = arith.constant 0 : i32
    %c0_i32_1 = arith.constant 0 : i32
    return %c0_i32, %c0_i32_0 : i32, i32
  }
  func.func @transform_4(%arg0: i32) -> (i32, i32) {
    %c0_i32 = arith.constant 0 : i32
    %c0_i32_0 = arith.constant 0 : i32
    %c0_i32_1 = arith.constant 0 : i32
    return %c0_i32, %c0_i32_0 : i32, i32
  }
  func.func @transform_5(%arg0: i32) -> (i32, i32) {
    %c0_i32 = arith.constant 0 : i32
    %c0_i32_0 = arith.constant 0 : i32
    return %arg0, %c0_i32 : i32, i32
  }
}

</mosaic_0001>

<llo_original>
// kernel: tpu_custom_call.1
$region0: #{tpu_custom_call.1}
  #allocation0 [shape = 'u32[]', space=smem, size = 0x4, offset = 0x4, fixed_abs, tag = 'smem constant byte address 0x4 - core index']
  #allocation1 [shape = 'u32[72,128]{1,0:T(1,128)}', space=vmem, size = 0x9000, scoped, tag = 'internal scratch']
  %s0 = inlined_call_operand.vmem [shape: bf16[64,16], index: 0, kind: input, shape index: {}]
  %s1 = inlined_call_operand.vmem [shape: bf16[16,128], index: 1, kind: input, shape index: {}]
  %s2 = inlined_call_operand.vmem [shape: f32[1,24], index: 2, kind: input, shape index: {}]
  %s3 = inlined_call_operand.vmem [shape: bf16[24,128], index: 3, kind: input, shape index: {}]
  %s4 = inlined_call_operand.vmem [shape: f32[1,128], index: 4, kind: input, shape index: {}]
  %s5 = inlined_call_operand.hbm [shape: f32[8,128], index: 5, kind: output, shape index: {}]
  %s6 = sld [smem:[#allocation0]]
  $region30: #{tpu_custom_call.1} parent=0
    _
  %s8 = ssub.s32 1, %s6
  %s9 = scalar_select 0, %s8, %s6
  $region1: #{tpu_custom_call.1} parent=0
    #allocation2 [shape = 'u8[4096]{0}', space=vmem, size = 0x1000, scoped, tag = 'output window, operand 0, single buffered']
    #allocation3 [shape = 's32[1]{0}', space=sflag, size = 0x4, scoped, tag = 'scoped memory for tpu_custom_call.1']
    %10 = vsyncpa [#allocation3], 0
    // Predicated region
    $region2: #{tpu_custom_call.1} parent=1 // pred_check
      _
    $region3: #{tpu_custom_call.1} parent=1 // pred_check_branch
      %12 = sbr.rel (0) target = $region5
    $region4: #{tpu_custom_call.1} parent=1 // pred_region
      _
    $region5: #{tpu_custom_call.1} parent=1 // pred_fallthru
      _
    // Predicated region
    $region6: #{tpu_custom_call.1} parent=1 // pred_check
      _
    $region7: #{tpu_custom_call.1} parent=1 // pred_check_branch
      %14 = sbr.rel (0) target = $region9
    $region8: #{tpu_custom_call.1} parent=1 // pred_region
      _
    $region9: #{tpu_custom_call.1} parent=1 // pred_fallthru
      _
    // Predicated region
    $region10: #{tpu_custom_call.1} parent=1 // pred_check
      _
    $region11: #{tpu_custom_call.1} parent=1 // pred_check_branch
      %16 = sbr.rel (0) target = $region13
    $region12: #{tpu_custom_call.1} parent=1 // pred_region
      _
    $region13: #{tpu_custom_call.1} parent=1 // pred_fallthru
      _
    // Predicated region
    $region14: #{tpu_custom_call.1} parent=1 // pred_check
      _
    $region15: #{tpu_custom_call.1} parent=1 // pred_check_branch
      %18 = sbr.rel (0) target = $region17
    $region16: #{tpu_custom_call.1} parent=1 // pred_region
      _
    $region17: #{tpu_custom_call.1} parent=1 // pred_fallthru
      _
    // Predicated region
    $region18: #{tpu_custom_call.1} parent=1 // pred_check
      _
    $region19: #{tpu_custom_call.1} parent=1 // pred_check_branch
      %20 = sbr.rel (0) target = $region21
    $region20: #{tpu_custom_call.1} parent=1 // pred_region
      _
    $region21: #{tpu_custom_call.1} parent=1 // pred_fallthru
      _
    %v22 = vld [vmem:[%s0] sm:$0xf]
    %v23 = vld [vmem:[%s0 + $0x4] sm:$0xf]
    %v24 = vld [vmem:[%s0 + $0x8] sm:$0xf]
    %v25 = vld [vmem:[%s0 + $0xc] sm:$0xf]
    %v26 = vld [vmem:[%s0 + $0x10] sm:$0xf]
    %v27 = vld [vmem:[%s0 + $0x14] sm:$0xf]
    %v28 = vld [vmem:[%s0 + $0x18] sm:$0xf]
    %v29 = vld [vmem:[%s0 + $0x1c] sm:$0xf]
    %v30 = vld [vmem:[%s1] sm:$0xf]
    %v31 = vld [vmem:[%s1 + $0x4] sm:$0xf]
    %v40 = vunpack.c.l.b16 %v22
    %v41 = vunpack.c.l.b16 %v23
    %v42 = vunpack.c.l.b16 %v24
    %v43 = vunpack.c.l.b16 %v25
    %v44 = vunpack.c.l.b16 %v26
    %v45 = vunpack.c.l.b16 %v27
    %v46 = vunpack.c.l.b16 %v28
    %v47 = vunpack.c.l.b16 %v29
    %v48 = vpack.c.b16 %v41, %v40
    %v49 = vpack.c.b16 %v43, %v42
    %v50 = vpack.c.b16 %v45, %v44
    %v51 = vpack.c.b16 %v47, %v46
    %v54 = vunpack.c.l.b16 %v30
    %v55 = vunpack.c.l.b16 %v31
    %v56 = vpack.c.b16 %v55, %v54
    %vm58 = vcmask 130048
    %v60 = vsel %vm58, %v48, 0
    %v63 = vsel %vm58, %v49, 0
    %v66 = vsel %vm58, %v50, 0
    %v69 = vsel %vm58, %v51, 0
    %71 = vmatpush.bf16.msra.mxu0 0
    %72 = vmatpush.bf16.msra.mxu0 0
    %73 = vmatpush.bf16.msra.mxu0 0
    %74 = vmatpush.bf16.msra.mxu0 0
    %75 = vmatpush.bf16.msra.mxu0 0
    %76 = vmatpush.bf16.msra.mxu0 0
    %77 = vmatpush.bf16.msra.mxu0 0
    %78 = vmatpush.bf16.msra.mxu0 %v56
    %79 = vmatmul.bf16.gmra.mxu0 %v60
    %v80 = vpop.f32.mrf.mxu0
    %v81 = vadd.f32 0.0, %v80
    %v82 = vpop.f32.mrf.mxu0
    %v83 = vadd.f32 0.0, %v82
    %84 = vmatmul.bf16.gmra.mxu0 %v63
    %v85 = vpop.f32.mrf.mxu0
    %v86 = vadd.f32 0.0, %v85
    %v87 = vpop.f32.mrf.mxu0
    %v88 = vadd.f32 0.0, %v87
    %89 = vmatmul.bf16.gmra.mxu0 %v66
    %v90 = vpop.f32.mrf.mxu0
    %v91 = vadd.f32 0.0, %v90
    %v92 = vpop.f32.mrf.mxu0
    %v93 = vadd.f32 0.0, %v92
    %94 = vmatmul.bf16.gmra.mxu0 %v69
    %v95 = vpop.f32.mrf.mxu0
    %v96 = vadd.f32 0.0, %v95
    %v97 = vpop.f32.mrf.mxu0
    %v98 = vadd.f32 0.0, %v97
    %99 = vdwg.mxu0
    %v108 = vrot.slane %v81, 1
    %v109 = vrot.slane %v83, 1
    %v110 = vrot.slane %v86, 1
    %v111 = vrot.slane %v88, 1
    %v112 = vrot.slane %v91, 1
    %v113 = vrot.slane %v93, 1
    %v114 = vrot.slane %v96, 1
    %v115 = vrot.slane %v98, 1
    %116 = vrot.lane.b32.xlu0 %v108, 120
    %v117 = vpop.permute.xlu0 %116
    %118 = vrot.lane.b32.xlu0 %v109, 120
    %v119 = vpop.permute.xlu0 %118
    %120 = vrot.lane.b32.xlu0 %v110, 120
    %v121 = vpop.permute.xlu0 %120
    %122 = vrot.lane.b32.xlu0 %v111, 120
    %v123 = vpop.permute.xlu0 %122
    %124 = vrot.lane.b32.xlu0 %v112, 120
    %v125 = vpop.permute.xlu0 %124
    %126 = vrot.lane.b32.xlu0 %v113, 120
    %v127 = vpop.permute.xlu0 %126
    %128 = vrot.lane.b32.xlu0 %v114, 120
    %v129 = vpop.permute.xlu0 %128
    %130 = vrot.lane.b32.xlu0 %v115, 120
    %v131 = vpop.permute.xlu0 %130
    %v140 = vadd.f32 %v81, %v117
    %v141 = vadd.f32 %v83, %v119
    %v142 = vadd.f32 %v86, %v121
    %v143 = vadd.f32 %v88, %v123
    %v144 = vadd.f32 %v91, %v125
    %v145 = vadd.f32 %v93, %v127
    %v146 = vadd.f32 %v96, %v129
    %v147 = vadd.f32 %v98, %v131
    %vm148 = vcmask 63488
    %v149 = vsel %vm148, %v140, -inf
    %v150 = vrot.slane %v149, 4
    %v151 = vmax.f32 %v149, %v150
    %v152 = vrot.slane %v151, 2
    %v153 = vmax.f32 %v151, %v152
    %v154 = vrot.slane %v153, 1
    %v155 = vmax.f32 %v153, %v154
    %v156 = vsel %vm148, %v141, -inf
    %v157 = vrot.slane %v156, 4
    %v158 = vmax.f32 %v156, %v157
    %v159 = vrot.slane %v158, 2
    %v160 = vmax.f32 %v158, %v159
    %v161 = vrot.slane %v160, 1
    %v162 = vmax.f32 %v160, %v161
    %v163 = vsel %vm148, %v142, -inf
    %v164 = vrot.slane %v163, 4
    %v165 = vmax.f32 %v163, %v164
    %v166 = vrot.slane %v165, 2
    %v167 = vmax.f32 %v165, %v166
    %v168 = vrot.slane %v167, 1
    %v169 = vmax.f32 %v167, %v168
    %v170 = vsel %vm148, %v143, -inf
    %v171 = vrot.slane %v170, 4
    %v172 = vmax.f32 %v170, %v171
    %v173 = vrot.slane %v172, 2
    %v174 = vmax.f32 %v172, %v173
    %v175 = vrot.slane %v174, 1
    %v176 = vmax.f32 %v174, %v175
    %v177 = vsel %vm148, %v144, -inf
    %v178 = vrot.slane %v177, 4
    %v179 = vmax.f32 %v177, %v178
    %v180 = vrot.slane %v179, 2
    %v181 = vmax.f32 %v179, %v180
    %v182 = vrot.slane %v181, 1
    %v183 = vmax.f32 %v181, %v182
    %v184 = vsel %vm148, %v145, -inf
    %v185 = vrot.slane %v184, 4
    %v186 = vmax.f32 %v184, %v185
    %v187 = vrot.slane %v186, 2
    %v188 = vmax.f32 %v186, %v187
    %v189 = vrot.slane %v188, 1
    %v190 = vmax.f32 %v188, %v189
    %v191 = vsel %vm148, %v146, -inf
    %v192 = vrot.slane %v191, 4
    %v193 = vmax.f32 %v191, %v192
    %v194 = vrot.slane %v193, 2
    %v195 = vmax.f32 %v193, %v194
    %v196 = vrot.slane %v195, 1
    %v197 = vmax.f32 %v195, %v196
    %v198 = vsel %vm148, %v147, -inf
    %v199 = vrot.slane %v198, 4
    %v200 = vmax.f32 %v198, %v199
    %v201 = vrot.slane %v200, 2
    %v202 = vmax.f32 %v200, %v201
    %v203 = vrot.slane %v202, 1
    %v204 = vmax.f32 %v202, %v203
    %v205 = vrot.slane %v81, 2
    %v206 = vrot.slane %v83, 2
    %v207 = vrot.slane %v86, 2
    %v208 = vrot.slane %v88, 2
    %v209 = vrot.slane %v91, 2
    %v210 = vrot.slane %v93, 2
    %v211 = vrot.slane %v96, 2
    %v212 = vrot.slane %v98, 2
    %213 = vrot.lane.b32.xlu0 %v205, 112
    %v214 = vpop.permute.xlu0 %213
    %215 = vrot.lane.b32.xlu0 %v206, 112
    %v216 = vpop.permute.xlu0 %215
    %217 = vrot.lane.b32.xlu0 %v207, 112
    %v218 = vpop.permute.xlu0 %217
    %219 = vrot.lane.b32.xlu0 %v208, 112
    %v220 = vpop.permute.xlu0 %219
    %221 = vrot.lane.b32.xlu0 %v209, 112
    %v222 = vpop.permute.xlu0 %221
    %223 = vrot.lane.b32.xlu0 %v210, 112
    %v224 = vpop.permute.xlu0 %223
    %225 = vrot.lane.b32.xlu0 %v211, 112
    %v226 = vpop.permute.xlu0 %225
    %227 = vrot.lane.b32.xlu0 %v212, 112
    %v228 = vpop.permute.xlu0 %227
    %v237 = vadd.f32 %v140, %v214
    %v238 = vadd.f32 %v141, %v216
    %v239 = vadd.f32 %v142, %v218
    %v240 = vadd.f32 %v143, %v220
    %v241 = vadd.f32 %v144, %v222
    %v242 = vadd.f32 %v145, %v224
    %v243 = vadd.f32 %v146, %v226
    %v244 = vadd.f32 %v147, %v228
    %vm245 = vcmask 193664
    %v246 = vsel %vm245, %v237, -inf
    %v247 = vrot.slane %v246, 4
    %v248 = vmax.f32 %v246, %v247
    %v249 = vrot.slane %v248, 2
    %v250 = vmax.f32 %v248, %v249
    %v251 = vrot.slane %v250, 1
    %v252 = vmax.f32 %v250, %v251
    %v253 = vsel %vm245, %v238, -inf
    %v254 = vrot.slane %v253, 4
    %v255 = vmax.f32 %v253, %v254
    %v256 = vrot.slane %v255, 2
    %v257 = vmax.f32 %v255, %v256
    %v258 = vrot.slane %v257, 1
    %v259 = vmax.f32 %v257, %v258
    %v260 = vsel %vm245, %v239, -inf
    %v261 = vrot.slane %v260, 4
    %v262 = vmax.f32 %v260, %v261
    %v263 = vrot.slane %v262, 2
    %v264 = vmax.f32 %v262, %v263
    %v265 = vrot.slane %v264, 1
    %v266 = vmax.f32 %v264, %v265
    %v267 = vsel %vm245, %v240, -inf
    %v268 = vrot.slane %v267, 4
    %v269 = vmax.f32 %v267, %v268
    %v270 = vrot.slane %v269, 2
    %v271 = vmax.f32 %v269, %v270
    %v272 = vrot.slane %v271, 1
    %v273 = vmax.f32 %v271, %v272
    %v274 = vsel %vm245, %v241, -inf
    %v275 = vrot.slane %v274, 4
    %v276 = vmax.f32 %v274, %v275
    %v277 = vrot.slane %v276, 2
    %v278 = vmax.f32 %v276, %v277
    %v279 = vrot.slane %v278, 1
    %v280 = vmax.f32 %v278, %v279
    %v281 = vsel %vm245, %v242, -inf
    %v282 = vrot.slane %v281, 4
    %v283 = vmax.f32 %v281, %v282
    %v284 = vrot.slane %v283, 2
    %v285 = vmax.f32 %v283, %v284
    %v286 = vrot.slane %v285, 1
    %v287 = vmax.f32 %v285, %v286
    %v288 = vsel %vm245, %v243, -inf
    %v289 = vrot.slane %v288, 4
    %v290 = vmax.f32 %v288, %v289
    %v291 = vrot.slane %v290, 2
    %v292 = vmax.f32 %v290, %v291
    %v293 = vrot.slane %v292, 1
    %v294 = vmax.f32 %v292, %v293
    %v295 = vsel %vm245, %v244, -inf
    %v296 = vrot.slane %v295, 4
    %v297 = vmax.f32 %v295, %v296
    %v298 = vrot.slane %v297, 2
    %v299 = vmax.f32 %v297, %v298
    %v300 = vrot.slane %v299, 1
    %v301 = vmax.f32 %v299, %v300
    %v302 = vrot.slane %v81, 3
    %v303 = vrot.slane %v83, 3
    %v304 = vrot.slane %v86, 3
    %v305 = vrot.slane %v88, 3
    %v306 = vrot.slane %v91, 3
    %v307 = vrot.slane %v93, 3
    %v308 = vrot.slane %v96, 3
    %v309 = vrot.slane %v98, 3
    %310 = vrot.lane.b32.xlu0 %v302, 104
    %v311 = vpop.permute.xlu0 %310
    %312 = vrot.lane.b32.xlu0 %v303, 104
    %v313 = vpop.permute.xlu0 %312
    %314 = vrot.lane.b32.xlu0 %v304, 104
    %v315 = vpop.permute.xlu0 %314
    %316 = vrot.lane.b32.xlu0 %v305, 104
    %v317 = vpop.permute.xlu0 %316
    %318 = vrot.lane.b32.xlu0 %v306, 104
    %v319 = vpop.permute.xlu0 %318
    %320 = vrot.lane.b32.xlu0 %v307, 104
    %v321 = vpop.permute.xlu0 %320
    %322 = vrot.lane.b32.xlu0 %v308, 104
    %v323 = vpop.permute.xlu0 %322
    %324 = vrot.lane.b32.xlu0 %v309, 104
    %v325 = vpop.permute.xlu0 %324
    %v334 = vadd.f32 %v237, %v311
    %v335 = vadd.f32 %v238, %v313
    %v336 = vadd.f32 %v239, %v315
    %v337 = vadd.f32 %v240, %v317
    %v338 = vadd.f32 %v241, %v319
    %v339 = vadd.f32 %v242, %v321
    %v340 = vadd.f32 %v243, %v323
    %v341 = vadd.f32 %v244, %v325
    %vm342 = vcmask 389440
    %v343 = vsel %vm342, %v334, -inf
    %v344 = vrot.slane %v343, 4
    %v345 = vmax.f32 %v343, %v344
    %v346 = vrot.slane %v345, 2
    %v347 = vmax.f32 %v345, %v346
    %v348 = vrot.slane %v347, 1
    %v349 = vmax.f32 %v347, %v348
    %v350 = vsel %vm342, %v335, -inf
    %v351 = vrot.slane %v350, 4
    %v352 = vmax.f32 %v350, %v351
    %v353 = vrot.slane %v352, 2
    %v354 = vmax.f32 %v352, %v353
    %v355 = vrot.slane %v354, 1
    %v356 = vmax.f32 %v354, %v355
    %v357 = vsel %vm342, %v336, -inf
    %v358 = vrot.slane %v357, 4
    %v359 = vmax.f32 %v357, %v358
    %v360 = vrot.slane %v359, 2
    %v361 = vmax.f32 %v359, %v360
    %v362 = vrot.slane %v361, 1
    %v363 = vmax.f32 %v361, %v362
    %v364 = vsel %vm342, %v337, -inf
    %v365 = vrot.slane %v364, 4
    %v366 = vmax.f32 %v364, %v365
    %v367 = vrot.slane %v366, 2
    %v368 = vmax.f32 %v366, %v367
    %v369 = vrot.slane %v368, 1
    %v370 = vmax.f32 %v368, %v369
    %v371 = vsel %vm342, %v338, -inf
    %v372 = vrot.slane %v371, 4
    %v373 = vmax.f32 %v371, %v372
    %v374 = vrot.slane %v373, 2
    %v375 = vmax.f32 %v373, %v374
    %v376 = vrot.slane %v375, 1
    %v377 = vmax.f32 %v375, %v376
    %v378 = vsel %vm342, %v339, -inf
    %v379 = vrot.slane %v378, 4
    %v380 = vmax.f32 %v378, %v379
    %v381 = vrot.slane %v380, 2
    %v382 = vmax.f32 %v380, %v381
    %v383 = vrot.slane %v382, 1
    %v384 = vmax.f32 %v382, %v383
    %v385 = vsel %vm342, %v340, -inf
    %v386 = vrot.slane %v385, 4
    %v387 = vmax.f32 %v385, %v386
    %v388 = vrot.slane %v387, 2
    %v389 = vmax.f32 %v387, %v388
    %v390 = vrot.slane %v389, 1
    %v391 = vmax.f32 %v389, %v390
    %v392 = vsel %vm342, %v341, -inf
    %v393 = vrot.slane %v392, 4
    %v394 = vmax.f32 %v392, %v393
    %v395 = vrot.slane %v394, 2
    %v396 = vmax.f32 %v394, %v395
    %v397 = vrot.slane %v396, 1
    %v398 = vmax.f32 %v396, %v397
    %vm407 = vcmask 1041409
    %v408 = vsel %vm407, %v162, %v155
    %vm409 = vcmask 1042434
    %v410 = vsel %vm409, %v169, %v408
    %vm411 = vcmask 1043459
    %v412 = vsel %vm411, %v176, %v410
    %vm413 = vcmask 1044484
    %v414 = vsel %vm413, %v183, %v412
    %vm415 = vcmask 1045509
    %v416 = vsel %vm415, %v190, %v414
    %vm417 = vcmask 1046534
    %v418 = vsel %vm417, %v197, %v416
    %vm419 = vcmask 1047559
    %v420 = vsel %vm419, %v204, %v418
    %v430 = vsel %vm407, %v259, %v252
    %v431 = vsel %vm409, %v266, %v430
    %v432 = vsel %vm411, %v273, %v431
    %v433 = vsel %vm413, %v280, %v432
    %v434 = vsel %vm415, %v287, %v433
    %v435 = vsel %vm417, %v294, %v434
    %v436 = vsel %vm419, %v301, %v435
    %437 = vrot.lane.b32.xlu0 %v436, 120
    %v438 = vpop.permute.xlu0 %437
    %v448 = vsel %vm407, %v356, %v349
    %v449 = vsel %vm409, %v363, %v448
    %v450 = vsel %vm411, %v370, %v449
    %v451 = vsel %vm413, %v377, %v450
    %v452 = vsel %vm415, %v384, %v451
    %v453 = vsel %vm417, %v391, %v452
    %v454 = vsel %vm419, %v398, %v453
    %455 = vrot.lane.b32.xlu0 %v454, 104
    %v456 = vpop.permute.xlu0 %455
    %vm458 = vcmask 64512
    %v459 = vsel %vm458, %v420, %v438
    %v460 = vsel %vm58, %v459, %v456
    %v461 = vld [vmem:[%s2] sm:$0x1]
    %v463 = vperm.slane %v461, 0
    %v465 = vadd.f32 %v460, %v463
    %v466 = vmax.f32 %v465, 0.0
    %v467 = vpack.c.bf16 %v466, %v466
    %v468 = vld [vmem:[%s3] sm:$0xf]
    %v469 = vld [vmem:[%s3 + $0x4] sm:$0xf]
    %v470 = vld [vmem:[%s3 + $0x8] sm:$0xf]
    %v471 = vld [vmem:[%s4] sm:$0x1]
    %v473 = vperm.slane %v471, 0
    %v478 = vunpack.c.l.b16 %v468
    %v479 = vunpack.c.l.b16 %v469
    %v480 = vunpack.c.l.b16 %v470
    %v481 = vpack.c.b16 %v479, %v478
    %v482 = vpack.c.b16 %v480, %v480
    %vm484 = vcmask 195584
    %v486 = vsel %vm484, %v467, 0
    %vm488 = vcmask 1043456
    %v490 = vsel %vm488, %v482, 0
    %492 = vmatpush.bf16.msra.mxu0 0
    %493 = vmatpush.bf16.msra.mxu0 0
    %494 = vmatpush.bf16.msra.mxu0 0
    %495 = vmatpush.bf16.msra.mxu0 0
    %496 = vmatpush.bf16.msra.mxu0 0
    %497 = vmatpush.bf16.msra.mxu0 0
    %498 = vmatpush.bf16.msra.mxu0 %v490
    %499 = vmatpush.bf16.msra.mxu0 %v481
    %500 = vmatmul.bf16.gmra.mxu0 %v486
    %v501 = vpop.f32.mrf.mxu0
    %v502 = vadd.f32 %v473, %v501
    %v503 = vpop.f32.mrf.mxu0
    %504 = vdwg.mxu0
    %505 = vst [vmem:[#allocation2] sm:$0xff] %v502
    // Predicated region
    $region22: #{tpu_custom_call.1} parent=1 // pred_check
      _
    $region23: #{tpu_custom_call.1} parent=1 // pred_check_branch
      %507 = sbr.rel (0) target = $region25
    $region24: #{tpu_custom_call.1} parent=1 // pred_region
      %509 = vsyncadd [#allocation3], 0
      %s511 = sshll.u32 [#allocation2], 4
      %s512 = int_to_ptr.vmem [resolvable:$true] %s511
      %s513 = sshll.u32 %s5, 4
      %s514 = int_to_ptr.hbm [resolvable:$true] %s513
      %516 = dma.vmem_to_hbm [thread:$0]  %s512, 128, %s514, [#allocation3]
    $region25: #{tpu_custom_call.1} parent=1 // pred_fallthru
      _
    // Predicated region
    $region26: #{tpu_custom_call.1} parent=1 // pred_check
      _
    $region27: #{tpu_custom_call.1} parent=1 // pred_check_branch
      %518 = sbr.rel (0) target = $region29
    $region28: #{tpu_custom_call.1} parent=1 // pred_region
      %520 = dma.done [#allocation3], 128
    $region29: #{tpu_custom_call.1} parent=1 // pred_fallthru
      _
    %521 = vsyncpa [#allocation3], 1

</llo_original>
